<compile_context>
chip_gen: v6e
topology: v6e:2x2x1
jax: 0.10.0
libtpu: 0.0.40
codegen_flags: <defaults>
</compile_context>

<pallas_src>
import functools

import jax
import jax.numpy as jnp
from jax.experimental import pallas as pl
from jax.experimental.pallas import tpu as pltpu


def _round_up(n: int, m: int) -> int:
    return (n + m - 1) // m * m


def classifier_head_kernel(x_ref, w1_ref, b1_ref, w2_ref, b2_ref, o_ref, *, inv_s):
    # x block: (TB, S, E) -> mean over the sequence axis (dim=1 in PyTorch).
    x = x_ref[...].astype(jnp.float32)
    xm = jnp.sum(x, axis=1) * inv_s                          # (TB, E)

    # linear1 + ReLU on the MXU. w1 may be bf16 (cast once in the wrapper);
    # accumulation stays in f32 via preferred_element_type.
    h = jnp.dot(xm.astype(w1_ref.dtype), w1_ref[...],
                preferred_element_type=jnp.float32)          # (TB, 2E)
    h = jnp.maximum(h + b1_ref[...], 0.0)

    # linear2 (N=1): VPU multiply + cross-lane reduce instead of a 1-column MXU
    # matmul; b2 is a scalar read from SMEM.
    y = jnp.sum(h * w2_ref[...], axis=-1) + b2_ref[0, 0]     # (TB,)

    # Lane-dense store: batch lives in the lane (last) dim of the output block.
    o_ref[...] = jax.nn.sigmoid(y).reshape(o_ref.shape).astype(o_ref.dtype)


def classifier_head(x, w1, b1, w2_row, b2):
    """x: (B, S, E); w1: (E, 2E); b1: (1, 2E); w2_row: (1, 2E); b2: (1, 1).

    Returns sigmoid(relu(mean(x, 1) @ w1 + b1) @ w2_row.T + b2) with shape (B, 1).
    """
    B, S, E = x.shape
    H = w1.shape[1]

    # ---- batch tiling (lane-dense output needs TB % 128 == 0 when split) ----
    row_bytes = S * E * 4                      # one batch row of x in f32
    vmem_budget = 16 * 1024 * 1024             # target for the double-buffered x block
    if B > 128:
        TB = 256 if 2 * 256 * row_bytes <= vmem_budget else 128
        TB = min(TB, _round_up(B, 128))
    else:
        TB = _round_up(B, 8)
    nb = pl.cdiv(B, TB)
    B_pad = nb * TB
    # TODO(synk): for very large S*E, add a sequence-reduction grid axis with a
    # (TB, E) f32 accumulator instead of holding the full (TB, S, E) block in VMEM.

    if B_pad != B:
        x = jnp.pad(x, ((0, B_pad - B), (0, 0), (0, 0)))

    # bf16 MXU operands (f32 accumulate) only pay off once the MXU M dim is
    # filled; keep the exact f32 path for small batches.
    matmul_dtype = jnp.bfloat16 if TB >= 128 else jnp.float32
    w1_in = w1.astype(matmul_dtype)

    kernel = functools.partial(classifier_head_kernel, inv_s=1.0 / S)

    out = pl.pallas_call(
        kernel,
        out_shape=jax.ShapeDtypeStruct((1, B_pad), jnp.float32),
        grid=(nb,),
        in_specs=[
            pl.BlockSpec((TB, S, E), lambda i: (i, 0, 0)),        # x batch tile
            pl.BlockSpec((E, H), lambda i: (0, 0)),               # w1 (resident)
            pl.BlockSpec((1, H), lambda i: (0, 0)),               # b1 (resident)
            pl.BlockSpec((1, H), lambda i: (0, 0)),               # w2 row (resident)
            pl.BlockSpec(memory_space=pltpu.MemorySpace.SMEM),    # b2 scalar
        ],
        out_specs=pl.BlockSpec((1, TB), lambda i: (0, i)),        # lane-dense output
        compiler_params=pltpu.CompilerParams(
            dimension_semantics=("parallel",),
            vmem_limit_bytes=32 * 1024 * 1024,
        ),
    )(x, w1_in, b1, w2_row, b2)

    return out[0, :B].reshape(B, 1)


def reference(x, w1, b1, w2_row, b2):
    xm = jnp.mean(x, axis=1)
    h = jnp.maximum(xm @ w1 + b1, 0.0)
    y = jnp.sum(h * w2_row, axis=-1, keepdims=True) + b2[0, 0]
    return jax.nn.sigmoid(y)


if __name__ == "__main__":
    # Small shapes consistent with the forward pass: batch=2, seq=8, embed=32.
    B, S, E = 2, 8, 32
    H = 2 * E

    key = jax.random.PRNGKey(0)
    kx, kw1, kb1, kw2, kb2 = jax.random.split(key, 5)

    x = jax.random.normal(kx, (B, S, E), dtype=jnp.float32)

    # PyTorch parameter shapes: linear1.weight (2E, E), linear2.weight (1, 2E).
    # w1 is stored transposed (E, 2E) for a row-major MXU matmul; w2 is kept as
    # its natural (1, 2E) row since the kernel uses a multiply + lane reduce.
    w1 = jax.random.normal(kw1, (E, H), dtype=jnp.float32) * 0.05
    b1 = jax.random.normal(kb1, (1, H), dtype=jnp.float32) * 0.05
    w2 = jax.random.normal(kw2, (1, H), dtype=jnp.float32) * 0.05
    b2 = jax.random.normal(kb2, (1, 1), dtype=jnp.float32) * 0.05

    out = classifier_head(x, w1, b1, w2, b2)
    out = jax.block_until_ready(out)

    ref = reference(x, w1, b1, w2, b2)
    assert out.shape == (B, 1), out.shape
    assert jnp.allclose(out, ref, atol=1e-5, rtol=1e-5), (out, ref)

    print("KERNEL_OK")
</pallas_src>

<mosaic_0001>
module attributes {stable_mosaic.version = 11 : i64} {
  func.func @classifier_head_kernel(%arg0: i32, %arg1: memref<8x8x32xf32, #tpu.memory_space<vmem>>, %arg2: memref<32x64xf32, #tpu.memory_space<vmem>>, %arg3: memref<1x64xf32, #tpu.memory_space<vmem>>, %arg4: memref<1x64xf32, #tpu.memory_space<vmem>>, %arg5: memref<1x1xf32, #tpu.memory_space<smem>>, %arg6: memref<1x8xf32, #tpu.memory_space<vmem>>) attributes {dimension_semantics = [#tpu.dimension_semantics<parallel>], iteration_bounds = array<i64: 1>, scalar_prefetch = 0 : i64, scratch_operands = 0 : i64, tpu.core_type = #tpu.core_type<tc>, window_params = [{transform_indices = @transform_0, window_bounds = array<i64: 8, 8, 32>}, {pipeline_mode = #tpu.pipeline_mode<synchronous>, transform_indices = @transform_1, window_bounds = array<i64: 32, 64>}, {pipeline_mode = #tpu.pipeline_mode<synchronous>, transform_indices = @transform_2, window_bounds = array<i64: 1, 64>}, {pipeline_mode = #tpu.pipeline_mode<synchronous>, transform_indices = @transform_3, window_bounds = array<i64: 1, 64>}, {transform_indices = @transform_4, window_bounds = array<i64: 1, 1>}, {transform_indices = @transform_5, window_bounds = array<i64: 1, 8>}]} {
    %c0 = arith.constant 0 : index
    %c0_0 = arith.constant 0 : index
    %c0_1 = arith.constant 0 : index
    %0 = vector.load %arg1[%c0, %c0_0, %c0_1] : memref<8x8x32xf32, #tpu.memory_space<vmem>>, vector<8x8x32xf32>
    %cst = arith.constant dense<0.000000e+00> : vector<8x32xf32>
    %1 = vector.multi_reduction <add>, %0, %cst [1] : vector<8x8x32xf32> to vector<8x32xf32>
    %cst_2 = arith.constant 1.250000e-01 : f32
    %2 = vector.broadcast %cst_2 : f32 to vector<8x32xf32>
    %3 = arith.mulf %1, %2 : vector<8x32xf32>
    %c0_3 = arith.constant 0 : index
    %c0_4 = arith.constant 0 : index
    %4 = vector.load %arg2[%c0_3, %c0_4] : memref<32x64xf32, #tpu.memory_space<vmem>>, vector<32x64xf32>
    %cst_5 = arith.constant dense<0.000000e+00> : vector<8x64xf32>
    %5 = tpu.matmul %3, %4, %cst_5 {dimension_numbers = #tpu.dot_dimension_numbers<[1], [0], [0], [1], [0, 0, 1, 1], [], []>} : vector<8x32xf32>, vector<32x64xf32>, vector<8x64xf32> -> vector<8x64xf32>
    %c0_6 = arith.constant 0 : index
    %c0_7 = arith.constant 0 : index
    %6 = vector.load %arg3[%c0_6, %c0_7] : memref<1x64xf32, #tpu.memory_space<vmem>>, vector<1x64xf32>
    %7 = vector.broadcast %6 : vector<1x64xf32> to vector<8x64xf32>
    %8 = arith.addf %5, %7 : vector<8x64xf32>
    %cst_8 = arith.constant 0.000000e+00 : f32
    %9 = vector.broadcast %cst_8 : f32 to vector<8x64xf32>
    %10 = arith.maximumf %8, %9 : vector<8x64xf32>
    %c0_9 = arith.constant 0 : index
    %c0_10 = arith.constant 0 : index
    %11 = vector.load %arg4[%c0_9, %c0_10] : memref<1x64xf32, #tpu.memory_space<vmem>>, vector<1x64xf32>
    %12 = vector.broadcast %11 : vector<1x64xf32> to vector<8x64xf32>
    %13 = arith.mulf %10, %12 : vector<8x64xf32>
    %cst_11 = arith.constant dense<0.000000e+00> : vector<8xf32>
    %14 = vector.multi_reduction <add>, %13, %cst_11 [1] : vector<8x64xf32> to vector<8xf32>
    %c0_12 = arith.constant 0 : index
    %c0_13 = arith.constant 0 : index
    %15 = memref.load %arg5[%c0_12, %c0_13] : memref<1x1xf32, #tpu.memory_space<smem>>
    %16 = vector.broadcast %15 : f32 to vector<8xf32>
    %17 = arith.addf %14, %16 : vector<8xf32>
    %18 = arith.negf %17 : vector<8xf32>
    %19 = math.exp %18 : vector<8xf32>
    %cst_14 = arith.constant 1.000000e+00 : f32
    %20 = vector.broadcast %cst_14 : f32 to vector<8xf32>
    %21 = arith.addf %20, %19 : vector<8xf32>
    %22 = arith.divf %20, %21 : vector<8xf32>
    %23 = vector.shape_cast %22 : vector<8xf32> to vector<1x8xf32>
    %c0_15 = arith.constant 0 : index
    %c0_16 = arith.constant 0 : index
    %24 = vector.load %arg6[%c0_15, %c0_16] : memref<1x8xf32, #tpu.memory_space<vmem>>, vector<1x8xf32>
    tpu.vector_store %arg6[%c0_15, %c0_16], %23 {strides = array<i32>} : memref<1x8xf32, #tpu.memory_space<vmem>>, vector<1x8xf32>,
    return
  }
  func.func @transform_0(%arg0: i32) -> (i32, i32, i32) {
    %c0_i32 = arith.constant 0 : i32
    %c0_i32_0 = arith.constant 0 : i32
    %c0_i32_1 = arith.constant 0 : i32
    return %arg0, %c0_i32, %c0_i32_0 : i32, i32, i32
  }
  func.func @transform_1(%arg0: i32) -> (i32, i32) {
    %c0_i32 = arith.constant 0 : i32
    %c0_i32_0 = arith.constant 0 : i32
    %c0_i32_1 = arith.constant 0 : i32
    return %c0_i32, %c0_i32_0 : i32, i32
  }
  func.func @transform_2(%arg0: i32) -> (i32, i32) {
    %c0_i32 = arith.constant 0 : i32
    %c0_i32_0 = arith.constant 0 : i32
    %c0_i32_1 = arith.constant 0 : i32
    return %c0_i32, %c0_i32_0 : i32, i32
  }
  func.func @transform_3(%arg0: i32) -> (i32, i32) {
    %c0_i32 = arith.constant 0 : i32
    %c0_i32_0 = arith.constant 0 : i32
    %c0_i32_1 = arith.constant 0 : i32
    return %c0_i32, %c0_i32_0 : i32, i32
  }
  func.func @transform_4(%arg0: i32) -> (i32, i32) {
    %c0_i32 = arith.constant 0 : i32
    %c0_i32_0 = arith.constant 0 : i32
    %c0_i32_1 = arith.constant 0 : i32
    return %c0_i32, %c0_i32_0 : i32, i32
  }
  func.func @transform_5(%arg0: i32) -> (i32, i32) {
    %c0_i32 = arith.constant 0 : i32
    %c0_i32_0 = arith.constant 0 : i32
    return %c0_i32, %arg0 : i32, i32
  }
}

</mosaic_0001>

<llo_original>
// kernel: tpu_custom_call.1
$region0: #{tpu_custom_call.1}
  #allocation0 [shape = 'u32[]', space=smem, size = 0x4, offset = 0x4, fixed_abs, tag = 'smem constant byte address 0x4 - core index']
  #allocation1 [shape = 'u32[144,128]{1,0:T(1,128)}', space=vmem, size = 0x12000, scoped, tag = 'internal scratch']
  #allocation2 [shape = 'f32[1,1]{1,0:T(1,128)S(6)}', space=smem, size = 0x200, scoped, tag = 'scoped memory for tpu_custom_call.1']
  %s0 = inlined_call_operand.hbm [shape: f32[8,8,32], index: 0, kind: input, shape index: {}]
  %s1 = inlined_call_operand.hbm [shape: f32[32,64], index: 1, kind: input, shape index: {}]
  %s2 = inlined_call_operand.vmem [shape: f32[1,64], index: 2, kind: input, shape index: {}]
  %s3 = inlined_call_operand.vmem [shape: f32[1,64], index: 3, kind: input, shape index: {}]
  %s4 = inlined_call_operand.<no memory space> [shape: f32[1,1], index: 4, kind: input, shape index: {}]
  %s5 = inlined_call_operand.hbm [shape: f32[1,8], index: 5, kind: output, shape index: {}]
  %s6 = sld [smem:[#allocation0]]
  $region38: #{tpu_custom_call.1} parent=0
    _
  %s8 = ssub.s32 1, %s6
  %s9 = scalar_select 0, %s8, %s6
  %10 = sst [smem:[#allocation2]] %s4
  $region1: #{tpu_custom_call.1} parent=0
    #allocation3 [shape = 'u8[32768]{0}', space=vmem, size = 0x8000, scoped, tag = 'input window, operand 0, single buffered']
    #allocation4 [shape = 's32[1]{0}', space=sflag, size = 0x4, scoped, tag = 'scoped memory for tpu_custom_call.1']
    #allocation5 [shape = 's32[1]{0}', space=sflag, size = 0x4, scoped, tag = 'scoped memory for tpu_custom_call.1']
    #allocation6 [shape = 'u8[16384]{0}', space=vmem, size = 0x4000, scoped, tag = 'input window, operand 1, single buffered']
    #allocation7 [shape = 's32[1]{0}', space=sflag, size = 0x4, scoped, tag = 'scoped memory for tpu_custom_call.1']
    #allocation8 [shape = 'u8[512]{0}', space=vmem, size = 0x400, scoped, tag = 'output window, operand 0, single buffered']
    %11 = vsyncpa [#allocation4], 0
    %12 = vsyncpa [#allocation7], 0
    %13 = vsyncpa [#allocation5], 0
    // Predicated region
    $region2: #{tpu_custom_call.1} parent=1 // pred_check
      _
    $region3: #{tpu_custom_call.1} parent=1 // pred_check_branch
      %15 = sbr.rel (0) target = $region5
    $region4: #{tpu_custom_call.1} parent=1 // pred_region
      %s17 = ssub.s32 1024, 1024
      %18 = vsyncadd [#allocation4], %s17
      %s19 = sshll.u32 [#allocation3], 4
      %s20 = int_to_ptr.vmem [resolvable:$true] %s19
      %25 = dma.hbm_to_vmem [thread:$0]  %s0, 1024, %s20, [#allocation4], 128, 128, 8
    $region5: #{tpu_custom_call.1} parent=1 // pred_fallthru
      _
    // Predicated region
    $region6: #{tpu_custom_call.1} parent=1 // pred_check
      _
    $region7: #{tpu_custom_call.1} parent=1 // pred_check_branch
      %27 = sbr.rel (0) target = $region9
    $region8: #{tpu_custom_call.1} parent=1 // pred_region
      %s29 = ssub.s32 512, 512
      %30 = vsyncadd [#allocation7], %s29
      %s31 = sshll.u32 [#allocation6], 4
      %s32 = int_to_ptr.vmem [resolvable:$true] %s31
      %37 = dma.hbm_to_vmem [thread:$0]  %s1, 512, %s32, [#allocation7], 128, 128, 8
    $region9: #{tpu_custom_call.1} parent=1 // pred_fallthru
      _
    // Predicated region
    $region10: #{tpu_custom_call.1} parent=1 // pred_check
      _
    $region11: #{tpu_custom_call.1} parent=1 // pred_check_branch
      %39 = sbr.rel (0) target = $region13
    $region12: #{tpu_custom_call.1} parent=1 // pred_region
      _
    $region13: #{tpu_custom_call.1} parent=1 // pred_fallthru
      _
    // Predicated region
    $region14: #{tpu_custom_call.1} parent=1 // pred_check
      _
    $region15: #{tpu_custom_call.1} parent=1 // pred_check_branch
      %41 = sbr.rel (0) target = $region17
    $region16: #{tpu_custom_call.1} parent=1 // pred_region
      _
    $region17: #{tpu_custom_call.1} parent=1 // pred_fallthru
      _
    // Predicated region
    $region18: #{tpu_custom_call.1} parent=1 // pred_check
      _
    $region19: #{tpu_custom_call.1} parent=1 // pred_check_branch
      %43 = sbr.rel (0) target = $region21
    $region20: #{tpu_custom_call.1} parent=1 // pred_region
      _
    $region21: #{tpu_custom_call.1} parent=1 // pred_fallthru
      _
    // Predicated region
    $region22: #{tpu_custom_call.1} parent=1 // pred_check
      _
    $region23: #{tpu_custom_call.1} parent=1 // pred_check_branch
      %45 = sbr.rel (0) target = $region25
    $region24: #{tpu_custom_call.1} parent=1 // pred_region
      %46 = dma.done [#allocation4], 1024
    $region25: #{tpu_custom_call.1} parent=1 // pred_fallthru
      _
    // Predicated region
    $region26: #{tpu_custom_call.1} parent=1 // pred_check
      _
    $region27: #{tpu_custom_call.1} parent=1 // pred_check_branch
      %48 = sbr.rel (0) target = $region29
    $region28: #{tpu_custom_call.1} parent=1 // pred_region
      %49 = dma.done [#allocation7], 512
    $region29: #{tpu_custom_call.1} parent=1 // pred_fallthru
      _
    %v50 = vld [vmem:[#allocation3] sm:$0xff]
    %v51 = vld [vmem:[#allocation3 + $0x8] sm:$0xff]
    %v52 = vld [vmem:[#allocation3 + $0x10] sm:$0xff]
    %v53 = vld [vmem:[#allocation3 + $0x18] sm:$0xff]
    %v54 = vld [vmem:[#allocation3 + $0x20] sm:$0xff]
    %v55 = vld [vmem:[#allocation3 + $0x28] sm:$0xff]
    %v56 = vld [vmem:[#allocation3 + $0x30] sm:$0xff]
    %v57 = vld [vmem:[#allocation3 + $0x38] sm:$0xff]
    %vm58 = vcmask 261120
    %v59 = vsel %vm58, %v50, 0.0
    %v60 = vrot.slane %v59, 4
    %v61 = vadd.f32 %v59, %v60
    %v62 = vrot.slane %v61, 2
    %v63 = vadd.f32 %v61, %v62
    %v64 = vrot.slane %v63, 1
    %v65 = vadd.f32 %v63, %v64
    %v66 = vsel %vm58, %v51, 0.0
    %v67 = vrot.slane %v66, 4
    %v68 = vadd.f32 %v66, %v67
    %v69 = vrot.slane %v68, 2
    %v70 = vadd.f32 %v68, %v69
    %v71 = vrot.slane %v70, 1
    %v72 = vadd.f32 %v70, %v71
    %v73 = vsel %vm58, %v52, 0.0
    %v74 = vrot.slane %v73, 4
    %v75 = vadd.f32 %v73, %v74
    %v76 = vrot.slane %v75, 2
    %v77 = vadd.f32 %v75, %v76
    %v78 = vrot.slane %v77, 1
    %v79 = vadd.f32 %v77, %v78
    %v80 = vsel %vm58, %v53, 0.0
    %v81 = vrot.slane %v80, 4
    %v82 = vadd.f32 %v80, %v81
    %v83 = vrot.slane %v82, 2
    %v84 = vadd.f32 %v82, %v83
    %v85 = vrot.slane %v84, 1
    %v86 = vadd.f32 %v84, %v85
    %v87 = vsel %vm58, %v54, 0.0
    %v88 = vrot.slane %v87, 4
    %v89 = vadd.f32 %v87, %v88
    %v90 = vrot.slane %v89, 2
    %v91 = vadd.f32 %v89, %v90
    %v92 = vrot.slane %v91, 1
    %v93 = vadd.f32 %v91, %v92
    %v94 = vsel %vm58, %v55, 0.0
    %v95 = vrot.slane %v94, 4
    %v96 = vadd.f32 %v94, %v95
    %v97 = vrot.slane %v96, 2
    %v98 = vadd.f32 %v96, %v97
    %v99 = vrot.slane %v98, 1
    %v100 = vadd.f32 %v98, %v99
    %v101 = vsel %vm58, %v56, 0.0
    %v102 = vrot.slane %v101, 4
    %v103 = vadd.f32 %v101, %v102
    %v104 = vrot.slane %v103, 2
    %v105 = vadd.f32 %v103, %v104
    %v106 = vrot.slane %v105, 1
    %v107 = vadd.f32 %v105, %v106
    %v108 = vsel %vm58, %v57, 0.0
    %v109 = vrot.slane %v108, 4
    %v110 = vadd.f32 %v108, %v109
    %v111 = vrot.slane %v110, 2
    %v112 = vadd.f32 %v110, %v111
    %v113 = vrot.slane %v112, 1
    %v114 = vadd.f32 %v112, %v113
    %v115 = vmul.f32 %v65, 0.125
    %v116 = vmul.f32 %v72, 0.125
    %v117 = vmul.f32 %v79, 0.125
    %v118 = vmul.f32 %v86, 0.125
    %v119 = vmul.f32 %v93, 0.125
    %v120 = vmul.f32 %v100, 0.125
    %v121 = vmul.f32 %v107, 0.125
    %v122 = vmul.f32 %v114, 0.125
    %v123 = vld [vmem:[#allocation6] sm:$0xff]
    %v124 = vld [vmem:[#allocation6 + $0x8] sm:$0xff]
    %v125 = vld [vmem:[#allocation6 + $0x10] sm:$0xff]
    %v126 = vld [vmem:[#allocation6 + $0x18] sm:$0xff]
    %v127 = vld [vmem:[%s2] sm:$0x1]
    %v129 = vlaneseq
    %v130 = vshrl.u32 %v129, 7
    %v131 = vsub.s32 0, %v130
    %v132 = vrot.slane %v127, %v131
    %vm142 = vcmask 1041409
    %v143 = vsel %vm142, %v116, %v115
    %vm144 = vcmask 1042434
    %v145 = vsel %vm144, %v117, %v143
    %vm146 = vcmask 1043459
    %v147 = vsel %vm146, %v118, %v145
    %vm148 = vcmask 1044484
    %v149 = vsel %vm148, %v119, %v147
    %vm150 = vcmask 1045509
    %v151 = vsel %vm150, %v120, %v149
    %vm152 = vcmask 1046534
    %v153 = vsel %vm152, %v121, %v151
    %vm154 = vcmask 1047559
    %v155 = vsel %vm154, %v122, %v153
    %v156 = vsel %vm58, %v155, 0
    %158 = vmatprep.subr.mxu0 0.0
    %159 = vmatpush1.msra.mxu0 0.0
    %160 = vmatprep.subr.mxu0 0.0
    %161 = vmatpush1.msra.mxu0 0.0
    %162 = vmatprep.subr.mxu0 0.0
    %163 = vmatpush1.msra.mxu0 0.0
    %164 = vmatprep.subr.mxu0 0.0
    %165 = vmatpush1.msra.mxu0 0.0
    %166 = vmatprep.subr.mxu0 0.0
    %167 = vmatpush1.msra.mxu0 0.0
    %168 = vmatprep.subr.mxu0 0.0
    %169 = vmatpush1.msra.mxu0 0.0
    %170 = vmatprep.subr.mxu0 0.0
    %171 = vmatpush1.msra.mxu0 0.0
    %172 = vmatprep.subr.mxu0 0.0
    %173 = vmatpush1.msra.mxu0 0.0
    %174 = vmatprep.subr.mxu0 0.0
    %175 = vmatpush1.msra.mxu0 0.0
    %176 = vmatprep.subr.mxu0 0.0
    %177 = vmatpush1.msra.mxu0 0.0
    %178 = vmatprep.subr.mxu0 0.0
    %179 = vmatpush1.msra.mxu0 0.0
    %180 = vmatprep.subr.mxu0 0.0
    %181 = vmatpush1.msra.mxu0 0.0
    %182 = vmatprep.subr.mxu0 0.0
    %183 = vmatpush1.msra.mxu0 %v126
    %184 = vmatprep.subr.mxu0 0.0
    %185 = vmatpush1.msra.mxu0 %v125
    %186 = vmatprep.subr.mxu0 0.0
    %187 = vmatpush1.msra.mxu0 %v124
    %188 = vmatprep.subr.mxu0 0.0
    %189 = vmatpush1.msra.mxu0 %v123
    %190 = vmatprep.subr.mxu0 0.0
    %191 = vmatpush2.msra.mxu0 0.0
    %192 = vmatprep.subr.mxu0 0.0
    %193 = vmatpush2.msra.mxu0 0.0
    %194 = vmatprep.subr.mxu0 0.0
    %195 = vmatpush2.msra.mxu0 0.0
    %196 = vmatprep.subr.mxu0 0.0
    %197 = vmatpush2.msra.mxu0 0.0
    %198 = vmatprep.subr.mxu0 0.0
    %199 = vmatpush2.msra.mxu0 0.0
    %200 = vmatprep.subr.mxu0 0.0
    %201 = vmatpush2.msra.mxu0 0.0
    %202 = vmatprep.subr.mxu0 0.0
    %203 = vmatpush2.msra.mxu0 0.0
    %204 = vmatprep.subr.mxu0 0.0
    %205 = vmatpush2.msra.mxu0 0.0
    %206 = vmatprep.subr.mxu0 0.0
    %207 = vmatpush2.msra.mxu0 0.0
    %208 = vmatprep.subr.mxu0 0.0
    %209 = vmatpush2.msra.mxu0 0.0
    %210 = vmatprep.subr.mxu0 0.0
    %211 = vmatpush2.msra.mxu0 0.0
    %212 = vmatprep.subr.mxu0 0.0
    %213 = vmatpush2.msra.mxu0 0.0
    %214 = vmatprep.subr.mxu0 0.0
    %215 = vmatpush2.msra.mxu0 0.0
    %216 = vmatprep.subr.mxu0 0.0
    %217 = vmatpush2.msra.mxu0 0.0
    %218 = vmatprep.subr.mxu0 0.0
    %219 = vmatpush2.msra.mxu0 0.0
    %220 = vmatprep.subr.mxu0 0.0
    %221 = vmatpush2.msra.mxu0 0.0
    %222 = vmatprep.mubr.f32.mxu0 0.0
    %223 = vmatmul.mubr.f32.gmra.mxu0 %v156
    %v224 = vpop.f32.mrf.mxu0
    %v225 = vadd.f32 %v132, %v224
    %v226 = vpop.f32.mrf.mxu0
    %227 = vdwg.mxu0
    %v228 = vmax.f32 %v225, 0.0
    %v229 = vld [vmem:[%s3] sm:$0x1]
    %v231 = vlaneseq
    %v232 = vshrl.u32 %v231, 7
    %v233 = vsub.s32 0, %v232
    %v234 = vrot.slane %v229, %v233
    %v236 = vmul.f32 %v228, %v234
    %vm237 = vcmask 523264
    %v238 = vsel %vm237, %v236, 0.0
    %239 = vadd.xlane.f32.xlu0 %v238
    %v240 = vpop.xlane.xlu0 %239
    %s241 = sld [smem:[#allocation2]]
    %v242 = vstv %s241
    %v243 = vadd.f32 %v240, %v242
    %v244 = vxor.u32 %v243, 2147483648
    %v245 = vmul.f32 %v244, 1.442695
    %v246 = vpow.pop %v245
    %v247 = vadd.f32 %v246, 1.0
    %v248 = vrcp.pop %v247
    %v249 = vmul.f32 1.0, %v248
    %v251 = vlaneseq
    %v252 = vand.u32 %v251, 127
    %v253 = vlaneseq
    %v254 = vshrl.u32 %v253, 7
    %v255 = vsub.s32 %v252, %v254
    %v256 = vrot.slane %v249, %v255
    %vm258 = vcmask 57344
    %259 = vst.msk [vmem:[#allocation8] sm:$0x1] %vm258, %v256
    // Predicated region
    $region30: #{tpu_custom_call.1} parent=1 // pred_check
      _
    $region31: #{tpu_custom_call.1} parent=1 // pred_check_branch
      %261 = sbr.rel (0) target = $region33
    $region32: #{tpu_custom_call.1} parent=1 // pred_region
      %s263 = ssub.s32 16, 16
      %264 = vsyncadd [#allocation5], %s263
      %s266 = sshll.u32 [#allocation8], 4
      %s267 = int_to_ptr.vmem [resolvable:$true] %s266
      %269 = dma.vmem_to_hbm [thread:$0]  %s267, 16, %s5, [#allocation5]
    $region33: #{tpu_custom_call.1} parent=1 // pred_fallthru
      _
    // Predicated region
    $region34: #{tpu_custom_call.1} parent=1 // pred_check
      _
    $region35: #{tpu_custom_call.1} parent=1 // pred_check_branch
      %271 = sbr.rel (0) target = $region37
    $region36: #{tpu_custom_call.1} parent=1 // pred_region
      %272 = dma.done [#allocation5], 16
    $region37: #{tpu_custom_call.1} parent=1 // pred_fallthru
      _
    %273 = vsyncpa [#allocation4], 1
    %274 = vsyncpa [#allocation7], 1
    %275 = vsyncpa [#allocation5], 1

</llo_original>
